<compile_context>
chip_gen: v7x
topology: tpu7x:2x2x1
jax: 0.10.0
libtpu: 0.0.40
codegen_flags: <defaults>
</compile_context>

<pallas_src>
import jax
import jax.numpy as jnp
from jax.experimental import pallas as pl
from jax.experimental.pallas import tpu as pltpu

DIN = 275
HIDDEN = 64


def encoder_kernel(x_ref, w_ref, b_ref, o_ref):
    # x_ref: (tm, DIN)  w_ref: (DIN, HIDDEN)  b_ref: (1, HIDDEN)
    # o_ref: (tm, HIDDEN)
    acc = jnp.dot(x_ref[...], w_ref[...], preferred_element_type=jnp.float32)
    acc = acc + b_ref[...]                       # bias broadcast over rows
    o_ref[...] = jnp.maximum(acc, 0.0).astype(o_ref.dtype)


def _round_up(n, m):
    return ((n + m - 1) // m) * m


def _choose_tm(B):
    """Row-tile choice.

    * B <= 256: single block (tm == B, allowed even if B % 8 != 0 since the
      block equals the full array dim) -> zero pipeline overhead.
    * 256 < B <= 4096: split into ~2 tiles (tm % 8 == 0) so the grid has >= 2
      "parallel" steps and v7x can shard across both TensorCores.
    * B > 4096: 2048-row tiles; per-step overhead amortized to <10%.
    """
    if B <= 256:
        return B
    if B <= 4096:
        return min(2048, _round_up(-(-B // 2), 8))
    return 2048


def prepare_params(w, b):
    """One-time param prep: PyTorch layout w [HIDDEN, DIN], b [HIDDEN] ->
    kernel operands w_t [DIN, HIDDEN], b2 [1, HIDDEN]."""
    assert w.shape == (HIDDEN, DIN) and b.shape == (HIDDEN,)
    return jnp.transpose(w), b.reshape(1, HIDDEN)


def encoder_forward(x, w_t, b2, *, tm=None):
    """x: [B, DIN] f32, w_t: [DIN, HIDDEN], b2: [1, HIDDEN] -> [B, HIDDEN]."""
    B, din = x.shape
    assert din == DIN and w_t.shape == (DIN, HIDDEN) and b2.shape == (1, HIDDEN)

    if tm is None:
        tm = _choose_tm(B)
    grid_m = pl.cdiv(B, tm)   # partial last tile handled (masked) by Pallas

    fsize = jnp.dtype(jnp.float32).itemsize
    cost = pl.CostEstimate(
        flops=2 * B * DIN * HIDDEN,
        transcendentals=0,
        bytes_accessed=(B * DIN + DIN * HIDDEN + HIDDEN + B * HIDDEN) * fsize,
    )

    return pl.pallas_call(
        encoder_kernel,
        out_shape=jax.ShapeDtypeStruct((B, HIDDEN), x.dtype),
        grid_spec=pltpu.PrefetchScalarGridSpec(
            num_scalar_prefetch=0,
            grid=(grid_m,),
            in_specs=[
                # row tile of the input; full feature (din) extent per block
                pl.BlockSpec((tm, DIN), lambda i: (i, 0)),
                # full weight matrix, resident across all grid steps
                pl.BlockSpec((DIN, HIDDEN), lambda i: (0, 0)),
                # bias row
                pl.BlockSpec((1, HIDDEN), lambda i: (0, 0)),
            ],
            out_specs=pl.BlockSpec((tm, HIDDEN), lambda i: (i, 0)),
        ),
        compiler_params=pltpu.CompilerParams(
            dimension_semantics=("parallel",),
        ),
        cost_estimate=cost,
    )(x, w_t, b2)


def init_params(key):
    # Deterministic synthetic params matching nn.Linear(275, 64) shapes.
    kw, kb = jax.random.split(key)
    bound = 1.0 / (DIN ** 0.5)  # PyTorch default uniform init range
    w = jax.random.uniform(kw, (HIDDEN, DIN), jnp.float32, -bound, bound)
    b = jax.random.uniform(kb, (HIDDEN,), jnp.float32, -bound, bound)
    return w, b


if __name__ == "__main__":
    key = jax.random.PRNGKey(0)
    kx, kp = jax.random.split(key)

    # Small batch of agent observations (latency path)
    B = 16
    x = jax.random.normal(kx, (B, DIN), jnp.float32)
    w, b = init_params(kp)                 # w: [HIDDEN, DIN] (PyTorch layout)
    w_t, b2 = prepare_params(w, b)         # one-time prep, hoisted out of fwd

    out = jax.block_until_ready(encoder_forward(x, w_t, b2))
    ref = jnp.maximum(x @ w_t + b[None, :], 0.0)
    assert out.shape == (B, HIDDEN)
    assert jnp.allclose(out, ref, atol=1e-5, rtol=1e-5)

    # Odd batch -> exercises the masked partial-tile / multi-tile path
    B2 = 1030
    x2 = jax.random.normal(jax.random.PRNGKey(7), (B2, DIN), jnp.float32)
    out2 = jax.block_until_ready(encoder_forward(x2, w_t, b2))
    ref2 = jnp.maximum(x2 @ w_t + b[None, :], 0.0)
    assert out2.shape == (B2, HIDDEN)
    assert jnp.allclose(out2, ref2, atol=1e-5, rtol=1e-5)

    print("KERNEL_OK")
</pallas_src>

<mosaic_0001>
module attributes {stable_mosaic.version = 11 : i64} {
  func.func @encoder_kernel(%arg0: i32, %arg1: memref<16x275xf32, #tpu.memory_space<vmem>>, %arg2: memref<275x64xf32, #tpu.memory_space<vmem>>, %arg3: memref<1x64xf32, #tpu.memory_space<vmem>>, %arg4: memref<16x64xf32, #tpu.memory_space<vmem>>) attributes {dimension_semantics = [#tpu.dimension_semantics<parallel>], iteration_bounds = array<i64: 1>, scalar_prefetch = 0 : i64, scratch_operands = 0 : i64, tpu.core_type = #tpu.core_type<tc>, window_params = [{transform_indices = @transform_0, window_bounds = array<i64: 16, 275>}, {pipeline_mode = #tpu.pipeline_mode<synchronous>, transform_indices = @transform_1, window_bounds = array<i64: 275, 64>}, {pipeline_mode = #tpu.pipeline_mode<synchronous>, transform_indices = @transform_2, window_bounds = array<i64: 1, 64>}, {transform_indices = @transform_3, window_bounds = array<i64: 16, 64>}]} {
    %c0 = arith.constant 0 : index
    %c0_0 = arith.constant 0 : index
    %0 = vector.load %arg1[%c0, %c0_0] : memref<16x275xf32, #tpu.memory_space<vmem>>, vector<16x275xf32>
    %c0_1 = arith.constant 0 : index
    %c0_2 = arith.constant 0 : index
    %1 = vector.load %arg2[%c0_1, %c0_2] : memref<275x64xf32, #tpu.memory_space<vmem>>, vector<275x64xf32>
    %cst = arith.constant dense<0.000000e+00> : vector<16x64xf32>
    %2 = tpu.matmul %0, %1, %cst {dimension_numbers = #tpu.dot_dimension_numbers<[1], [0], [0], [1], [0, 0, 1, 1], [], []>} : vector<16x275xf32>, vector<275x64xf32>, vector<16x64xf32> -> vector<16x64xf32>
    %c0_3 = arith.constant 0 : index
    %c0_4 = arith.constant 0 : index
    %3 = vector.load %arg3[%c0_3, %c0_4] : memref<1x64xf32, #tpu.memory_space<vmem>>, vector<1x64xf32>
    %4 = vector.broadcast %3 : vector<1x64xf32> to vector<16x64xf32>
    %5 = arith.addf %2, %4 : vector<16x64xf32>
    %cst_5 = arith.constant 0.000000e+00 : f32
    %6 = vector.broadcast %cst_5 : f32 to vector<16x64xf32>
    %7 = arith.maximumf %5, %6 : vector<16x64xf32>
    %c0_6 = arith.constant 0 : index
    %c0_7 = arith.constant 0 : index
    %8 = vector.load %arg4[%c0_6, %c0_7] : memref<16x64xf32, #tpu.memory_space<vmem>>, vector<16x64xf32>
    tpu.vector_store %arg4[%c0_6, %c0_7], %7 {strides = array<i32>} : memref<16x64xf32, #tpu.memory_space<vmem>>, vector<16x64xf32>,
    return
  }
  func.func @transform_0(%arg0: i32) -> (i32, i32) {
    %c0_i32 = arith.constant 0 : i32
    %c0_i32_0 = arith.constant 0 : i32
    return %arg0, %c0_i32 : i32, i32
  }
  func.func @transform_1(%arg0: i32) -> (i32, i32) {
    %c0_i32 = arith.constant 0 : i32
    %c0_i32_0 = arith.constant 0 : i32
    %c0_i32_1 = arith.constant 0 : i32
    return %c0_i32, %c0_i32_0 : i32, i32
  }
  func.func @transform_2(%arg0: i32) -> (i32, i32) {
    %c0_i32 = arith.constant 0 : i32
    %c0_i32_0 = arith.constant 0 : i32
    %c0_i32_1 = arith.constant 0 : i32
    return %c0_i32, %c0_i32_0 : i32, i32
  }
  func.func @transform_3(%arg0: i32) -> (i32, i32) {
    %c0_i32 = arith.constant 0 : i32
    %c0_i32_0 = arith.constant 0 : i32
    return %arg0, %c0_i32 : i32, i32
  }
}

</mosaic_0001>

<llo_original>
// kernel: tpu_custom_call.1
$region0: #{tpu_custom_call.1}
  #allocation0 [shape = 'u32[]', space=smem, size = 0x4, offset = 0x4, fixed_abs, tag = 'smem constant byte address 0x4 - core index']
  #allocation1 [shape = 'u32[144,128]{1,0:T(1,128)}', space=vmem, size = 0x12000, scoped, tag = 'internal scratch']
  %s0 = inlined_call_operand.vmem [shape: f32[16,275], index: 0, kind: input, shape index: {}]
  %s1 = inlined_call_operand.vmem [shape: f32[275,64], index: 1, kind: input, shape index: {}]
  %s2 = inlined_call_operand.vmem [shape: f32[1,64], index: 2, kind: input, shape index: {}]
  %s3 = inlined_call_operand.hbm [shape: f32[16,64], index: 3, kind: output, shape index: {}]
  %s4 = sld [smem:[#allocation0]]
  $region22: #{tpu_custom_call.1} parent=0
    _
  %s6 = ssub.s32 1, %s4
  %s7 = scalar_select 0, %s6, %s4
  $region1: #{tpu_custom_call.1} parent=0
    #allocation2 [shape = 'u8[8192]{0}', space=vmem, size = 0x2000, scoped, tag = 'output window, operand 0, single buffered']
    #allocation3 [shape = 's32[1]{0}', space=sflag, size = 0x4, scoped, tag = 'scoped memory for tpu_custom_call.1']
    %8 = vsyncpa [#allocation3], 0
    // Predicated region
    $region2: #{tpu_custom_call.1} parent=1 // pred_check
      _
    $region3: #{tpu_custom_call.1} parent=1 // pred_check_branch
      %10 = sbr.rel (0) target = $region5
    $region4: #{tpu_custom_call.1} parent=1 // pred_region
      _
    $region5: #{tpu_custom_call.1} parent=1 // pred_fallthru
      _
    // Predicated region
    $region6: #{tpu_custom_call.1} parent=1 // pred_check
      _
    $region7: #{tpu_custom_call.1} parent=1 // pred_check_branch
      %12 = sbr.rel (0) target = $region9
    $region8: #{tpu_custom_call.1} parent=1 // pred_region
      _
    $region9: #{tpu_custom_call.1} parent=1 // pred_fallthru
      _
    // Predicated region
    $region10: #{tpu_custom_call.1} parent=1 // pred_check
      _
    $region11: #{tpu_custom_call.1} parent=1 // pred_check_branch
      %14 = sbr.rel (0) target = $region13
    $region12: #{tpu_custom_call.1} parent=1 // pred_region
      _
    $region13: #{tpu_custom_call.1} parent=1 // pred_fallthru
      _
    %v15 = vld [vmem:[%s0] sm:$0xff]
    %v16 = vld [vmem:[%s0 + $0x8] sm:$0xff]
    %v17 = vld [vmem:[%s0 + $0x10] sm:$0xff]
    %v18 = vld [vmem:[%s0 + $0x18] sm:$0xff]
    %v19 = vld [vmem:[%s0 + $0x20] sm:$0xff]
    %v20 = vld [vmem:[%s0 + $0x28] sm:$0xff]
    %v21 = vld [vmem:[%s1] sm:$0xff]
    %v22 = vld [vmem:[%s1 + $0x8] sm:$0xff]
    %v23 = vld [vmem:[%s1 + $0x10] sm:$0xff]
    %v24 = vld [vmem:[%s1 + $0x18] sm:$0xff]
    %v25 = vld [vmem:[%s1 + $0x20] sm:$0xff]
    %v26 = vld [vmem:[%s1 + $0x28] sm:$0xff]
    %v27 = vld [vmem:[%s1 + $0x30] sm:$0xff]
    %v28 = vld [vmem:[%s1 + $0x38] sm:$0xff]
    %v29 = vld [vmem:[%s1 + $0x40] sm:$0xff]
    %v30 = vld [vmem:[%s1 + $0x48] sm:$0xff]
    %v31 = vld [vmem:[%s1 + $0x50] sm:$0xff]
    %v32 = vld [vmem:[%s1 + $0x58] sm:$0xff]
    %v33 = vld [vmem:[%s1 + $0x60] sm:$0xff]
    %v34 = vld [vmem:[%s1 + $0x68] sm:$0xff]
    %v35 = vld [vmem:[%s1 + $0x70] sm:$0xff]
    %v36 = vld [vmem:[%s1 + $0x78] sm:$0xff]
    %v37 = vld [vmem:[%s1 + $0x80] sm:$0xff]
    %v38 = vld [vmem:[%s1 + $0x88] sm:$0xff]
    %v39 = vld [vmem:[%s1 + $0x90] sm:$0xff]
    %v40 = vld [vmem:[%s1 + $0x98] sm:$0xff]
    %v41 = vld [vmem:[%s1 + $0xa0] sm:$0xff]
    %v42 = vld [vmem:[%s1 + $0xa8] sm:$0xff]
    %v43 = vld [vmem:[%s1 + $0xb0] sm:$0xff]
    %v44 = vld [vmem:[%s1 + $0xb8] sm:$0xff]
    %v45 = vld [vmem:[%s1 + $0xc0] sm:$0xff]
    %v46 = vld [vmem:[%s1 + $0xc8] sm:$0xff]
    %v47 = vld [vmem:[%s1 + $0xd0] sm:$0xff]
    %v48 = vld [vmem:[%s1 + $0xd8] sm:$0xff]
    %v49 = vld [vmem:[%s1 + $0xe0] sm:$0xff]
    %v50 = vld [vmem:[%s1 + $0xe8] sm:$0xff]
    %v51 = vld [vmem:[%s1 + $0xf0] sm:$0xff]
    %v52 = vld [vmem:[%s1 + $0xf8] sm:$0xff]
    %v53 = vld [vmem:[%s1 + $0x100] sm:$0xff]
    %v54 = vld [vmem:[%s1 + $0x108] sm:$0xff]
    %v55 = vld [vmem:[%s1 + $0x110] sm:$0x7]
    %v56 = vld [vmem:[%s2] sm:$0x1]
    %v58 = vlaneseq
    %v59 = vshrl.u32 %v58, 7
    %v60 = vsub.s32 0, %v59
    %v61 = vrot.slane %v56, %v60
    %vm63 = vcmask 154624
    %v65 = vsel %vm63, %v17, 0
    %v68 = vsel %vm63, %v20, 0
    %vm70 = vcmask 1042432
    %v72 = vsel %vm70, %v55, 0
    %74 = vmatprep.subr.mxu0 0.0
    %75 = vmatpush1.msra.mxu0 %v21
    %76 = vmatprep.subr.mxu0 0.0
    %77 = vmatpush1.msra.mxu0 %v22
    %78 = vmatprep.subr.mxu0 0.0
    %79 = vmatpush1.msra.mxu0 %v23
    %80 = vmatprep.subr.mxu0 0.0
    %81 = vmatpush1.msra.mxu0 %v24
    %82 = vmatprep.subr.mxu0 0.0
    %83 = vmatpush1.msra.mxu0 %v25
    %84 = vmatprep.subr.mxu0 0.0
    %85 = vmatpush1.msra.mxu0 %v26
    %86 = vmatprep.subr.mxu0 0.0
    %87 = vmatpush1.msra.mxu0 %v27
    %88 = vmatprep.subr.mxu0 0.0
    %89 = vmatpush1.msra.mxu0 %v28
    %90 = vmatprep.subr.mxu0 0.0
    %91 = vmatpush1.msra.mxu0 %v29
    %92 = vmatprep.subr.mxu0 0.0
    %93 = vmatpush1.msra.mxu0 %v30
    %94 = vmatprep.subr.mxu0 0.0
    %95 = vmatpush1.msra.mxu0 %v31
    %96 = vmatprep.subr.mxu0 0.0
    %97 = vmatpush1.msra.mxu0 %v32
    %98 = vmatprep.subr.mxu0 0.0
    %99 = vmatpush1.msra.mxu0 %v33
    %100 = vmatprep.subr.mxu0 0.0
    %101 = vmatpush1.msra.mxu0 %v34
    %102 = vmatprep.subr.mxu0 0.0
    %103 = vmatpush1.msra.mxu0 %v35
    %104 = vmatprep.subr.mxu0 0.0
    %105 = vmatpush1.msra.mxu0 %v36
    %106 = vmatprep.subr.mxu0 0.0
    %107 = vmatpush1.msra.mxu0 %v37
    %108 = vmatprep.subr.mxu0 0.0
    %109 = vmatpush1.msra.mxu0 %v38
    %110 = vmatprep.subr.mxu0 0.0
    %111 = vmatpush1.msra.mxu0 %v39
    %112 = vmatprep.subr.mxu0 0.0
    %113 = vmatpush1.msra.mxu0 %v40
    %114 = vmatprep.subr.mxu0 0.0
    %115 = vmatpush1.msra.mxu0 %v41
    %116 = vmatprep.subr.mxu0 0.0
    %117 = vmatpush1.msra.mxu0 %v42
    %118 = vmatprep.subr.mxu0 0.0
    %119 = vmatpush1.msra.mxu0 %v43
    %120 = vmatprep.subr.mxu0 0.0
    %121 = vmatpush1.msra.mxu0 %v44
    %122 = vmatprep.subr.mxu0 0.0
    %123 = vmatpush1.msra.mxu0 %v45
    %124 = vmatprep.subr.mxu0 0.0
    %125 = vmatpush1.msra.mxu0 %v46
    %126 = vmatprep.subr.mxu0 0.0
    %127 = vmatpush1.msra.mxu0 %v47
    %128 = vmatprep.subr.mxu0 0.0
    %129 = vmatpush1.msra.mxu0 %v48
    %130 = vmatprep.subr.mxu0 0.0
    %131 = vmatpush1.msra.mxu0 %v49
    %132 = vmatprep.subr.mxu0 0.0
    %133 = vmatpush1.msra.mxu0 %v50
    %134 = vmatprep.subr.mxu0 0.0
    %135 = vmatpush1.msra.mxu0 %v51
    %136 = vmatprep.subr.mxu0 0.0
    %137 = vmatpush1.msra.mxu0 %v52
    %138 = vmatprep.mubr.f32.mxu0 %v16
    %139 = vmatmul.mubr.f32.gmra.mrb[0].mxu0 %v15
    %v140 = vpop.f32.mrb[0].mxu0
    %v141 = vadd.f32 %v61, %v140
    %v142 = vpop.f32.mrb[0].mxu0
    %143 = vmatprep.mubr.f32.mxu0 %v19
    %144 = vmatmul.mubr.f32.gmra.mrb[0].mxu0 %v18
    %v145 = vpop.f32.mrb[0].mxu0
    %v146 = vadd.f32 %v61, %v145
    %v147 = vpop.f32.mrb[0].mxu0
    %148 = vdwg.mxu0
    %149 = vmatprep.subr.mxu0 0.0
    %150 = vmatpush1.msra.mxu0 %v53
    %151 = vmatprep.subr.mxu0 0.0
    %152 = vmatpush1.msra.mxu0 %v54
    %153 = vmatprep.subr.mxu0 0.0
    %154 = vmatpush1.msra.mxu0 %v72
    %155 = vmatprep.subr.mxu0 0.0
    %156 = vmatpush1.msra.mxu0 0.0
    %157 = vmatprep.subr.mxu0 0.0
    %158 = vmatpush1.msra.mxu0 0.0
    %159 = vmatprep.subr.mxu0 0.0
    %160 = vmatpush1.msra.mxu0 0.0
    %161 = vmatprep.subr.mxu0 0.0
    %162 = vmatpush1.msra.mxu0 0.0
    %163 = vmatprep.subr.mxu0 0.0
    %164 = vmatpush1.msra.mxu0 0.0
    %165 = vmatprep.subr.mxu0 0.0
    %166 = vmatpush1.msra.mxu0 0.0
    %167 = vmatprep.subr.mxu0 0.0
    %168 = vmatpush1.msra.mxu0 0.0
    %169 = vmatprep.subr.mxu0 0.0
    %170 = vmatpush1.msra.mxu0 0.0
    %171 = vmatprep.subr.mxu0 0.0
    %172 = vmatpush1.msra.mxu0 0.0
    %173 = vmatprep.subr.mxu0 0.0
    %174 = vmatpush1.msra.mxu0 0.0
    %175 = vmatprep.subr.mxu0 0.0
    %176 = vmatpush1.msra.mxu0 0.0
    %177 = vmatprep.subr.mxu0 0.0
    %178 = vmatpush1.msra.mxu0 0.0
    %179 = vmatprep.subr.mxu0 0.0
    %180 = vmatpush1.msra.mxu0 0.0
    %181 = vmatprep.subr.mxu0 0.0
    %182 = vmatpush1.msra.mxu0 0.0
    %183 = vmatprep.subr.mxu0 0.0
    %184 = vmatpush1.msra.mxu0 0.0
    %185 = vmatprep.subr.mxu0 0.0
    %186 = vmatpush1.msra.mxu0 0.0
    %187 = vmatprep.subr.mxu0 0.0
    %188 = vmatpush1.msra.mxu0 0.0
    %189 = vmatprep.subr.mxu0 0.0
    %190 = vmatpush1.msra.mxu0 0.0
    %191 = vmatprep.subr.mxu0 0.0
    %192 = vmatpush1.msra.mxu0 0.0
    %193 = vmatprep.subr.mxu0 0.0
    %194 = vmatpush1.msra.mxu0 0.0
    %195 = vmatprep.subr.mxu0 0.0
    %196 = vmatpush1.msra.mxu0 0.0
    %197 = vmatprep.subr.mxu0 0.0
    %198 = vmatpush1.msra.mxu0 0.0
    %199 = vmatprep.subr.mxu0 0.0
    %200 = vmatpush1.msra.mxu0 0.0
    %201 = vmatprep.subr.mxu0 0.0
    %202 = vmatpush1.msra.mxu0 0.0
    %203 = vmatprep.subr.mxu0 0.0
    %204 = vmatpush1.msra.mxu0 0.0
    %205 = vmatprep.subr.mxu0 0.0
    %206 = vmatpush1.msra.mxu0 0.0
    %207 = vmatprep.subr.mxu0 0.0
    %208 = vmatpush1.msra.mxu0 0.0
    %209 = vmatprep.subr.mxu0 0.0
    %210 = vmatpush1.msra.mxu0 0.0
    %211 = vmatprep.subr.mxu0 0.0
    %212 = vmatpush1.msra.mxu0 0.0
    %213 = vmatprep.mubr.f32.mxu0 0.0
    %214 = vmatmul.mubr.f32.gmra.mrb[0].mxu0 %v65
    %v215 = vpop.f32.mrb[0].mxu0
    %v216 = vadd.f32 %v141, %v215
    %v217 = vpop.f32.mrb[0].mxu0
    %218 = vmatprep.mubr.f32.mxu0 0.0
    %219 = vmatmul.mubr.f32.gmra.mrb[0].mxu0 %v68
    %v220 = vpop.f32.mrb[0].mxu0
    %v221 = vadd.f32 %v146, %v220
    %v222 = vpop.f32.mrb[0].mxu0
    %223 = vdwg.mxu0
    %v224 = vmax.f32 %v216, 0.0
    %v225 = vmax.f32 %v221, 0.0
    %vm226 = vcmask 523264
    %227 = vst.msk [vmem:[#allocation2] sm:$0xff] %vm226, %v224
    %228 = vst.msk [vmem:[#allocation2 + $0x8] sm:$0xff] %vm226, %v225
    // Predicated region
    $region14: #{tpu_custom_call.1} parent=1 // pred_check
      _
    $region15: #{tpu_custom_call.1} parent=1 // pred_check_branch
      %230 = sbr.rel (0) target = $region17
    $region16: #{tpu_custom_call.1} parent=1 // pred_region
      %s232 = ssub.s32 256, 256
      %233 = vsyncadd [#allocation3], %s232
      %s234 = sshll.u32 [#allocation2], 4
      %s235 = int_to_ptr.vmem [resolvable:$true] %s234
      %240 = dma.vmem_to_hbm [thread:$0]  %s235, 256, %s3, [#allocation3], 128, 128, 8
    $region17: #{tpu_custom_call.1} parent=1 // pred_fallthru
      _
    // Predicated region
    $region18: #{tpu_custom_call.1} parent=1 // pred_check
      _
    $region19: #{tpu_custom_call.1} parent=1 // pred_check_branch
      %242 = sbr.rel (0) target = $region21
    $region20: #{tpu_custom_call.1} parent=1 // pred_region
      %243 = dma.done [#allocation3], 256
    $region21: #{tpu_custom_call.1} parent=1 // pred_fallthru
      _
    %244 = vsyncpa [#allocation3], 1

</llo_original>
